<compile_context>
chip_gen: v6e
topology: v6e:2x2x1
jax: 0.10.0
libtpu: 0.0.40
codegen_flags: <defaults>
</compile_context>

<pallas_src>
import jax
import jax.numpy as jnp
from jax.experimental import pallas as pl
from jax.experimental.pallas import tpu as pltpu

GAMMA_EPS = 2.0 ** (-16)


def gamma_rescale_kernel(x_ref, g_ref, o_ref):
    """Elementwise gamma-rescaling hot path.

    x_ref: (row_block, lane_block) tile of the flattened input (native dtype)
    g_ref: (row_block, 1)          per-row, pre-remapped gamma (f32)
    o_ref: (row_block, lane_block) output tile (same dtype as input)
    """
    x = x_ref[...].astype(jnp.float32)
    gc = g_ref[...]                      # (row_block, 1) broadcasts over lanes

    # map x from [-1, 1] into (0, 1)
    y = jnp.clip(x, -1.0 + GAMMA_EPS, 1.0 - GAMMA_EPS)
    y = (y + 1.0) * 0.5

    # gamma correction: y ** gc  (y > 0 guaranteed by the clamp above;
    # lowers to exp(gc * log(y)) on the EUP — overlaps with the DMA)
    y = y ** gc

    # map back to [-1, 1]
    o_ref[...] = (y * 2.0 - 1.0).astype(o_ref.dtype)


def _round_up(x: int, m: int) -> int:
    return ((x + m - 1) // m) * m


def gamma_rescaling(x_nchw: jnp.ndarray, gamma_param: jnp.ndarray,
                    max_row_block: int = 256,
                    max_lane_block: int = 2048) -> jnp.ndarray:
    """Forward pass of GammaRescaling.

    x_nchw:      (N, C, H, W) float32 or bfloat16
    gamma_param: (1, C, 1, 1) (the nn.Parameter `learned_value`)
    """
    N, C, H, W = x_nchw.shape
    dtype = x_nchw.dtype
    rows = N * C
    cols = H * W

    # --- precompute the gamma clamp/remap on the tiny (C,) parameter -------
    g = gamma_param.reshape(C).astype(jnp.float32)
    gc = jnp.clip(g, GAMMA_EPS, 2.0 - GAMMA_EPS)
    gc = jnp.where(gc < 1.0, gc, 1.0 / (2.0 - gc))

    # --- tile-size selection (multiples of 8 sublanes x 128 lanes) ---------
    row_block = min(max_row_block, _round_up(rows, 8))
    lane_block = min(max_lane_block, _round_up(cols, 128))
    rows_p = _round_up(rows, row_block)
    cols_p = _round_up(cols, lane_block)

    # --- glue: flatten, pad (only if ragged), build per-row gamma ----------
    x2d = x_nchw.reshape(rows, cols)                       # no dtype cast
    if (rows_p, cols_p) != (rows, cols):
        x2d = jnp.pad(x2d, ((0, rows_p - rows), (0, cols_p - cols)))

    g2d = jnp.broadcast_to(gc[None, :], (N, C)).reshape(rows, 1)
    if rows_p != rows:
        g2d = jnp.pad(g2d, ((0, rows_p - rows), (0, 0)),
                      constant_values=1.0)

    grid = (rows_p // row_block, cols_p // lane_block)

    out2d = pl.pallas_call(
        gamma_rescale_kernel,
        out_shape=jax.ShapeDtypeStruct((rows_p, cols_p), dtype),
        grid_spec=pltpu.PrefetchScalarGridSpec(
            num_scalar_prefetch=0,
            grid=grid,
            in_specs=[
                pl.BlockSpec((row_block, lane_block), lambda i, j: (i, j)),
                # gamma stays resident across the lane axis: one tiny DMA
                # per row-block, broadcast over lanes in-register.
                pl.BlockSpec((row_block, 1), lambda i, j: (i, 0)),
            ],
            out_specs=pl.BlockSpec((row_block, lane_block),
                                   lambda i, j: (i, j)),
        ),
        compiler_params=pltpu.CompilerParams(
            dimension_semantics=("parallel", "parallel")),
    )(x2d, g2d)

    return out2d[:rows, :cols].reshape(N, C, H, W)


def gamma_rescaling_ref(x, gamma):
    """Pure-JAX reference mirroring the PyTorch forward."""
    gc = jnp.clip(gamma.astype(jnp.float32), GAMMA_EPS, 2.0 - GAMMA_EPS)
    gc = jnp.where(gc < 1.0, gc, 1.0 / (2.0 - gc))
    y = jnp.clip(x.astype(jnp.float32), -1.0 + GAMMA_EPS, 1.0 - GAMMA_EPS)
    y = (y + 1.0) / 2.0
    y = y ** gc
    return (y * 2.0 - 1.0).astype(x.dtype)


if __name__ == "__main__":
    key = jax.random.PRNGKey(0)
    N, C, H, W = 2, 4, 16, 16

    # Input in roughly [-1.5, 1.5] so the clamp path is exercised.
    x = jax.random.uniform(key, (N, C, H, W), jnp.float32,
                           minval=-1.5, maxval=1.5)

    # Module __init__: learned_value = torch.full(parameter_shape, 1.0)
    # with parameter_shape = (1, C, 1, 1). Perturb slightly so both the
    # gamma<1 and gamma>=1 remap branches are exercised.
    gamma_param = jnp.full((1, C, 1, 1), 1.0, dtype=jnp.float32)
    gamma_param = gamma_param + jnp.array([-0.3, 0.0, 0.3, 0.7],
                                          dtype=jnp.float32).reshape(1, C, 1, 1)

    out = gamma_rescaling(x, gamma_param)
    out = jax.block_until_ready(out)

    ref = gamma_rescaling_ref(x, gamma_param)
    assert out.shape == (N, C, H, W)
    assert out.dtype == x.dtype
    assert jnp.allclose(out, ref, atol=1e-5, rtol=1e-5)

    print("KERNEL_OK")
</pallas_src>

<mosaic_0001>
module attributes {stable_mosaic.version = 11 : i64} {
  func.func @gamma_rescale_kernel(%arg0: i32, %arg1: i32, %arg2: memref<8x256xf32, #tpu.memory_space<vmem>>, %arg3: memref<8x1xf32, #tpu.memory_space<vmem>>, %arg4: memref<8x256xf32, #tpu.memory_space<vmem>>) attributes {dimension_semantics = [#tpu.dimension_semantics<parallel>, #tpu.dimension_semantics<parallel>], iteration_bounds = array<i64: 1, 1>, scalar_prefetch = 0 : i64, scratch_operands = 0 : i64, tpu.core_type = #tpu.core_type<tc>, window_params = [{transform_indices = @transform_0, window_bounds = array<i64: 8, 256>}, {transform_indices = @transform_1, window_bounds = array<i64: 8, 1>}, {transform_indices = @transform_2, window_bounds = array<i64: 8, 256>}]} {
    %c0 = arith.constant 0 : index
    %c0_0 = arith.constant 0 : index
    %0 = vector.load %arg2[%c0, %c0_0] : memref<8x256xf32, #tpu.memory_space<vmem>>, vector<8x256xf32>
    %c0_1 = arith.constant 0 : index
    %c0_2 = arith.constant 0 : index
    %1 = vector.load %arg3[%c0_1, %c0_2] : memref<8x1xf32, #tpu.memory_space<vmem>>, vector<8x1xf32>
    %cst = arith.constant -0.999984741 : f32
    %cst_3 = arith.constant 0.999984741 : f32
    %2 = vector.broadcast %cst : f32 to vector<8x256xf32>
    %3 = arith.maximumf %2, %0 : vector<8x256xf32>
    %4 = vector.broadcast %cst_3 : f32 to vector<8x256xf32>
    %5 = arith.minimumf %4, %3 : vector<8x256xf32>
    %cst_4 = arith.constant 1.000000e+00 : f32
    %6 = vector.broadcast %cst_4 : f32 to vector<8x256xf32>
    %7 = arith.addf %5, %6 : vector<8x256xf32>
    %cst_5 = arith.constant 5.000000e-01 : f32
    %8 = vector.broadcast %cst_5 : f32 to vector<8x256xf32>
    %9 = arith.mulf %7, %8 : vector<8x256xf32>
    %10 = vector.broadcast %1 : vector<8x1xf32> to vector<8x256xf32>
    %11 = math.powf %9, %10 : vector<8x256xf32>
    %cst_6 = arith.constant 2.000000e+00 : f32
    %12 = vector.broadcast %cst_6 : f32 to vector<8x256xf32>
    %13 = arith.mulf %11, %12 : vector<8x256xf32>
    %cst_7 = arith.constant 1.000000e+00 : f32
    %14 = vector.broadcast %cst_7 : f32 to vector<8x256xf32>
    %15 = arith.subf %13, %14 : vector<8x256xf32>
    %c0_8 = arith.constant 0 : index
    %c0_9 = arith.constant 0 : index
    %16 = vector.load %arg4[%c0_8, %c0_9] : memref<8x256xf32, #tpu.memory_space<vmem>>, vector<8x256xf32>
    tpu.vector_store %arg4[%c0_8, %c0_9], %15 {strides = array<i32>} : memref<8x256xf32, #tpu.memory_space<vmem>>, vector<8x256xf32>,
    return
  }
  func.func @transform_0(%arg0: i32, %arg1: i32) -> (i32, i32) {
    %c0_i32 = arith.constant 0 : i32
    return %arg0, %arg1 : i32, i32
  }
  func.func @transform_1(%arg0: i32, %arg1: i32) -> (i32, i32) {
    %c0_i32 = arith.constant 0 : i32
    %c0_i32_0 = arith.constant 0 : i32
    return %arg0, %c0_i32 : i32, i32
  }
  func.func @transform_2(%arg0: i32, %arg1: i32) -> (i32, i32) {
    %c0_i32 = arith.constant 0 : i32
    return %arg0, %arg1 : i32, i32
  }
}

</mosaic_0001>

<llo_original>
// kernel: tpu_custom_call.1
$region0: #{tpu_custom_call.1}
  #allocation0 [shape = 'u32[]', space=smem, size = 0x4, offset = 0x4, fixed_abs, tag = 'smem constant byte address 0x4 - core index']
  #allocation1 [shape = 'u32[144,128]{1,0:T(1,128)}', space=vmem, size = 0x12000, scoped, tag = 'internal scratch']
  %s0 = inlined_call_operand.hbm [shape: f32[8,256], index: 0, kind: input, shape index: {}]
  %s1 = inlined_call_operand.vmem [shape: f32[8,1], index: 1, kind: input, shape index: {}]
  %s2 = inlined_call_operand.hbm [shape: f32[8,256], index: 2, kind: output, shape index: {}]
  %s3 = sld [smem:[#allocation0]]
  $region22: #{tpu_custom_call.1} parent=0
    _
  %s5 = ssub.s32 1, %s3
  %s6 = scalar_select 0, %s5, %s3
  $region1: #{tpu_custom_call.1} parent=0
    #allocation2 [shape = 'u8[8192]{0}', space=vmem, size = 0x2000, scoped, tag = 'input window, operand 0, single buffered']
    #allocation3 [shape = 's32[1]{0}', space=sflag, size = 0x4, scoped, tag = 'scoped memory for tpu_custom_call.1']
    #allocation4 [shape = 's32[1]{0}', space=sflag, size = 0x4, scoped, tag = 'scoped memory for tpu_custom_call.1']
    #allocation5 [shape = 'u8[8192]{0}', space=vmem, size = 0x2000, scoped, tag = 'output window, operand 0, single buffered']
    %7 = vsyncpa [#allocation3], 0
    %8 = vsyncpa [#allocation4], 0
    // Predicated region
    $region2: #{tpu_custom_call.1} parent=1 // pred_check
      _
    $region3: #{tpu_custom_call.1} parent=1 // pred_check_branch
      %10 = sbr.rel (0) target = $region5
    $region4: #{tpu_custom_call.1} parent=1 // pred_region
      %s12 = ssub.s32 256, 256
      %13 = vsyncadd [#allocation3], %s12
      %s15 = sshll.u32 [#allocation2], 4
      %s16 = int_to_ptr.vmem [resolvable:$true] %s15
      %18 = dma.hbm_to_vmem [thread:$0]  %s0, 256, %s16, [#allocation3]
    $region5: #{tpu_custom_call.1} parent=1 // pred_fallthru
      _
    // Predicated region
    $region6: #{tpu_custom_call.1} parent=1 // pred_check
      _
    $region7: #{tpu_custom_call.1} parent=1 // pred_check_branch
      %20 = sbr.rel (0) target = $region9
    $region8: #{tpu_custom_call.1} parent=1 // pred_region
      _
    $region9: #{tpu_custom_call.1} parent=1 // pred_fallthru
      _
    // Predicated region
    $region10: #{tpu_custom_call.1} parent=1 // pred_check
      _
    $region11: #{tpu_custom_call.1} parent=1 // pred_check_branch
      %22 = sbr.rel (0) target = $region13
    $region12: #{tpu_custom_call.1} parent=1 // pred_region
      %23 = dma.done [#allocation3], 256
    $region13: #{tpu_custom_call.1} parent=1 // pred_fallthru
      _
    %v24 = vld [vmem:[#allocation2] sm:$0xff]
    %v25 = vld [vmem:[#allocation2 + $0x8] sm:$0xff]
    %v26 = vld [vmem:[%s1] sm:$0xff]
    %v27 = vmax.f32 %v24, -0.99998474
    %v28 = vmax.f32 %v25, -0.99998474
    %v29 = vmin.f32 %v27, 0.99998474
    %v30 = vmin.f32 %v28, 0.99998474
    %v31 = vadd.f32 %v29, 1.0
    %v32 = vadd.f32 %v30, 1.0
    %v33 = vmul.f32 %v31, 0.5
    %v34 = vmul.f32 %v32, 0.5
    %36 = vset.pattern.permute.xlu0 0
    %37 = vperm.xlu0 %36, %v26
    %v38 = vpop.permute.xlu0 %37
    %v40 = vpow.f32 %v33, %v38
    %v41 = vpow.f32 %v34, %v38
    %v42 = vmul.f32 %v40, 2.0
    %v43 = vmul.f32 %v41, 2.0
    %v44 = vsub.f32 %v42, 1.0
    %v45 = vsub.f32 %v43, 1.0
    %46 = vst [vmem:[#allocation5] sm:$0xff] %v44
    %47 = vst [vmem:[#allocation5 + $0x8] sm:$0xff] %v45
    // Predicated region
    $region14: #{tpu_custom_call.1} parent=1 // pred_check
      _
    $region15: #{tpu_custom_call.1} parent=1 // pred_check_branch
      %49 = sbr.rel (0) target = $region17
    $region16: #{tpu_custom_call.1} parent=1 // pred_region
      %s51 = ssub.s32 256, 256
      %52 = vsyncadd [#allocation4], %s51
      %s54 = sshll.u32 [#allocation5], 4
      %s55 = int_to_ptr.vmem [resolvable:$true] %s54
      %57 = dma.vmem_to_hbm [thread:$0]  %s55, 256, %s2, [#allocation4]
    $region17: #{tpu_custom_call.1} parent=1 // pred_fallthru
      _
    // Predicated region
    $region18: #{tpu_custom_call.1} parent=1 // pred_check
      _
    $region19: #{tpu_custom_call.1} parent=1 // pred_check_branch
      %59 = sbr.rel (0) target = $region21
    $region20: #{tpu_custom_call.1} parent=1 // pred_region
      %60 = dma.done [#allocation4], 256
    $region21: #{tpu_custom_call.1} parent=1 // pred_fallthru
      _
    %61 = vsyncpa [#allocation3], 1
    %62 = vsyncpa [#allocation4], 1

</llo_original>
